<compile_context>
chip_gen: v6e
topology: v6e:2x2x1
jax: 0.10.0
libtpu: 0.0.40
codegen_flags: <defaults>
</compile_context>

<pallas_src>
import functools

import jax
import jax.numpy as jnp
from jax import lax
from jax.experimental import pallas as pl
from jax.experimental.pallas import tpu as pltpu


def _round_up(x, m):
    return ((x + m - 1) // m) * m


def cmgc_kernel(x_ref, w1_ref, b1_ref, w2_ref, b2_ref, out_ref,
                *, n_class, n_class_pad):
    # x_ref:  (tile_n, 2*n_feat_p)   stacked [xr | xi]
    # w1_ref: (2*n_feat_p, 2*n_hid_p)   [[w1r, w1i], [-w1i, w1r]]
    # w2_ref: (2*n_hid_p, 2*n_class_p)  [[w2r, w2i], [-w2i, w2r]]
    # b*_ref: (1, 2*n_hid_p) / (1, 2*n_class_p)  stacked [br | bi] in f32
    x = x_ref[...]

    # ---- CLinear 1 (single stacked MXU dot) + CReLU (f32 epilogue) -------
    h = jnp.dot(x, w1_ref[...], preferred_element_type=jnp.float32)
    h = h + b1_ref[...]
    h = jnp.maximum(h, 0.0)          # CReLU on both halves at once

    # ---- Dropout: identity at inference ----------------------------------
    # TODO(synk): training-mode complex dropout (shared mask on re/im) not
    # implemented; forward matches eval() semantics.

    # ---- CLinear 2 (single stacked MXU dot) -------------------------------
    h = h.astype(w2_ref.dtype)       # feed bf16/f32 into the MXU, f32 acc
    z = jnp.dot(h, w2_ref[...], preferred_element_type=jnp.float32)
    z = z + b2_ref[...]

    # ---- modLogSoftmax(dim=1): log_softmax over |z| on the real classes ---
    zr = z[:, :n_class_pad]          # lane-aligned split (n_class_pad % 128 == 0)
    zi = z[:, n_class_pad:]
    mod = jnp.sqrt(zr * zr + zi * zi)

    # Mask out padded class lanes so they do not contribute to max / sum.
    mask = lax.broadcasted_iota(jnp.int32, mod.shape, 1) < n_class
    m = jnp.max(jnp.where(mask, mod, -jnp.inf), axis=-1, keepdims=True)
    e = jnp.where(mask, jnp.exp(mod - m), 0.0)
    lse = jnp.log(jnp.sum(e, axis=-1, keepdims=True)) + m
    out_ref[...] = mod - lse         # padded lanes hold garbage; sliced outside


def cmgc_forward(xr, xi, params, *, tile_n=None, matmul_dtype=jnp.bfloat16):
    """Fused CMGC forward.  xr, xi: [N, n_feat] float32.  Returns [N, n_class]."""
    (w1r, w1i, b1r, b1i, w2r, w2i, b2r, b2i) = params
    N, n_feat = xr.shape
    n_hid = w1r.shape[1]
    n_class = w2r.shape[1]

    # ---- lane-dense padded sizes -----------------------------------------
    n_feat_p = _round_up(n_feat, 64)     # stacked K = 2*n_feat_p  -> %128
    n_hid_p = _round_up(n_hid, 64)       # stacked H = 2*n_hid_p   -> %128
    n_class_p = _round_up(n_class, 128)  # split boundary must be lane-aligned
    K1 = 2 * n_feat_p
    H2 = 2 * n_hid_p
    C2 = 2 * n_class_p

    # ---- row tile: large, but keep >=2 grid steps when possible (v7x) -----
    if tile_n is None:
        if N >= 512:
            tile_n = 256
        elif N >= 16:
            tile_n = _round_up(_round_up(N, 8) // 2, 8)
        else:
            tile_n = 8
    N_p = _round_up(N, tile_n)
    grid = (N_p // tile_n,)

    # ---- build padded / stacked operands in the wrapper --------------------
    f32 = jnp.float32

    def pad2(a, rows, cols):
        a = a.astype(f32)
        return jnp.pad(a, ((0, rows - a.shape[0]), (0, cols - a.shape[1])))

    xr_p = pad2(xr, N_p, n_feat_p)
    xi_p = pad2(xi, N_p, n_feat_p)
    x_big = jnp.concatenate([xr_p, xi_p], axis=1).astype(matmul_dtype)

    w1r_p = pad2(w1r, n_feat_p, n_hid_p)
    w1i_p = pad2(w1i, n_feat_p, n_hid_p)
    w2r_p = pad2(w2r, n_hid_p, n_class_p)
    w2i_p = pad2(w2i, n_hid_p, n_class_p)

    # [xr|xi] @ [[Wr, Wi], [-Wi, Wr]] = [xr Wr - xi Wi | xr Wi + xi Wr]
    w1_big = jnp.concatenate(
        [jnp.concatenate([w1r_p, w1i_p], axis=1),
         jnp.concatenate([-w1i_p, w1r_p], axis=1)], axis=0).astype(matmul_dtype)
    w2_big = jnp.concatenate(
        [jnp.concatenate([w2r_p, w2i_p], axis=1),
         jnp.concatenate([-w2i_p, w2r_p], axis=1)], axis=0).astype(matmul_dtype)

    b1_big = jnp.concatenate([pad2(b1r, 1, n_hid_p), pad2(b1i, 1, n_hid_p)],
                             axis=1)                    # f32
    b2_big = jnp.concatenate([pad2(b2r, 1, n_class_p), pad2(b2i, 1, n_class_p)],
                             axis=1)                    # f32

    # ---- specs -------------------------------------------------------------
    x_spec = pl.BlockSpec((tile_n, K1), lambda i: (i, 0))
    w1_spec = pl.BlockSpec((K1, H2), lambda i: (0, 0))
    b1_spec = pl.BlockSpec((1, H2), lambda i: (0, 0))
    w2_spec = pl.BlockSpec((H2, C2), lambda i: (0, 0))
    b2_spec = pl.BlockSpec((1, C2), lambda i: (0, 0))
    out_spec = pl.BlockSpec((tile_n, n_class_p), lambda i: (i, 0))

    # ---- VMEM budget (default double-buffering assumed; v7x has 64 MiB) ----
    mm_bytes = jnp.dtype(matmul_dtype).itemsize
    in_bytes = (tile_n * K1 + K1 * H2 + H2 * C2) * mm_bytes + (H2 + C2) * 4
    out_bytes = tile_n * n_class_p * 4
    vmem_needed = 2 * (in_bytes + out_bytes)
    vmem_limit = int(min(64 * 1024 * 1024,
                         max(2 * vmem_needed, 32 * 1024 * 1024)))

    # ---- cost estimate (scheduling hint for XLA) ---------------------------
    flops = int(2 * N_p * K1 * H2 + 2 * N_p * H2 * C2)
    transcendentals = int(2 * N_p * n_class_p + N_p)     # exp + sqrt (+ log)
    bytes_accessed = int(
        N_p * K1 * mm_bytes
        + grid[0] * (K1 * H2 + H2 * C2) * mm_bytes
        + grid[0] * (H2 + C2) * 4
        + N_p * n_class_p * 4)

    kernel = functools.partial(cmgc_kernel, n_class=n_class,
                               n_class_pad=n_class_p)

    out_p = pl.pallas_call(
        kernel,
        out_shape=jax.ShapeDtypeStruct((N_p, n_class_p), jnp.float32),
        grid_spec=pltpu.PrefetchScalarGridSpec(
            num_scalar_prefetch=0,
            grid=grid,
            in_specs=[x_spec, w1_spec, b1_spec, w2_spec, b2_spec],
            out_specs=out_spec,
        ),
        compiler_params=pltpu.CompilerParams(
            dimension_semantics=("parallel",),
            vmem_limit_bytes=vmem_limit),
        cost_estimate=pl.CostEstimate(
            flops=flops,
            transcendentals=transcendentals,
            bytes_accessed=bytes_accessed),
    )(x_big, w1_big, b1_big, w2_big, b2_big)

    return out_p[:N, :n_class]


def init_params(key, n_feat, n_hid, n_class):
    """Deterministic synthetic parameter init (complex weights as re/im pairs).
    Weights are stored already transposed: [in_features, out_features]."""
    ks = jax.random.split(key, 8)
    s1 = 1.0 / jnp.sqrt(n_feat)
    s2 = 1.0 / jnp.sqrt(n_hid)
    w1r = jax.random.uniform(ks[0], (n_feat, n_hid), jnp.float32, -s1, s1)
    w1i = jax.random.uniform(ks[1], (n_feat, n_hid), jnp.float32, -s1, s1)
    b1r = jax.random.uniform(ks[2], (1, n_hid), jnp.float32, -s1, s1)
    b1i = jax.random.uniform(ks[3], (1, n_hid), jnp.float32, -s1, s1)
    w2r = jax.random.uniform(ks[4], (n_hid, n_class), jnp.float32, -s2, s2)
    w2i = jax.random.uniform(ks[5], (n_hid, n_class), jnp.float32, -s2, s2)
    b2r = jax.random.uniform(ks[6], (1, n_class), jnp.float32, -s2, s2)
    b2i = jax.random.uniform(ks[7], (1, n_class), jnp.float32, -s2, s2)
    return (w1r, w1i, b1r, b1i, w2r, w2i, b2r, b2i)


def reference_forward(xr, xi, params):
    """Pure-JAX f32 reference of the same forward."""
    (w1r, w1i, b1r, b1i, w2r, w2i, b2r, b2i) = params
    h_r = xr @ w1r - xi @ w1i + b1r
    h_i = xr @ w1i + xi @ w1r + b1i
    h_r = jnp.maximum(h_r, 0.0)
    h_i = jnp.maximum(h_i, 0.0)
    z_r = h_r @ w2r - h_i @ w2i + b2r
    z_i = h_r @ w2i + h_i @ w2r + b2i
    mod = jnp.sqrt(z_r * z_r + z_i * z_i)
    return jax.nn.log_softmax(mod, axis=1)


if __name__ == "__main__":
    # Small shapes consistent with the module: x is [N, n_feat] complex,
    # split into real / imag float32 arrays.
    N, n_feat, n_hid, n_class = 64, 32, 64, 10

    key = jax.random.PRNGKey(0)
    kx, kp = jax.random.split(key)
    kxr, kxi = jax.random.split(kx)
    xr = jax.random.normal(kxr, (N, n_feat), jnp.float32)
    xi = jax.random.normal(kxi, (N, n_feat), jnp.float32)
    params = init_params(kp, n_feat, n_hid, n_class)

    ref = reference_forward(xr, xi, params)

    # Full-precision path: must match the f32 reference tightly.
    out_f32 = cmgc_forward(xr, xi, params, matmul_dtype=jnp.float32)
    out_f32 = jax.block_until_ready(out_f32)
    assert out_f32.shape == (N, n_class)
    assert jnp.allclose(out_f32, ref, atol=1e-5, rtol=1e-5)

    # bf16 MXU path (v6e/v7x fast path): f32 accumulation + f32 epilogue,
    # looser tolerance due to bf16 operand rounding.
    out_bf16 = cmgc_forward(xr, xi, params, matmul_dtype=jnp.bfloat16)
    out_bf16 = jax.block_until_ready(out_bf16)
    assert out_bf16.shape == (N, n_class)
    assert jnp.allclose(out_bf16, ref, atol=1.5e-1, rtol=1.5e-1)

    print("KERNEL_OK")
</pallas_src>

<mosaic_0001>
module attributes {stable_mosaic.version = 11 : i64} {
  func.func @cmgc_kernel(%arg0: i32, %arg1: memref<32x128xf32, #tpu.memory_space<vmem>>, %arg2: memref<128x128xf32, #tpu.memory_space<vmem>>, %arg3: memref<1x128xf32, #tpu.memory_space<vmem>>, %arg4: memref<128x256xf32, #tpu.memory_space<vmem>>, %arg5: memref<1x256xf32, #tpu.memory_space<vmem>>, %arg6: memref<32x128xf32, #tpu.memory_space<vmem>>) attributes {dimension_semantics = [#tpu.dimension_semantics<parallel>], iteration_bounds = array<i64: 2>, scalar_prefetch = 0 : i64, scratch_operands = 0 : i64, tpu.core_type = #tpu.core_type<tc>, window_params = [{transform_indices = @transform_0, window_bounds = array<i64: 32, 128>}, {pipeline_mode = #tpu.pipeline_mode<synchronous>, transform_indices = @transform_1, window_bounds = array<i64: 128, 128>}, {pipeline_mode = #tpu.pipeline_mode<synchronous>, transform_indices = @transform_2, window_bounds = array<i64: 1, 128>}, {pipeline_mode = #tpu.pipeline_mode<synchronous>, transform_indices = @transform_3, window_bounds = array<i64: 128, 256>}, {pipeline_mode = #tpu.pipeline_mode<synchronous>, transform_indices = @transform_4, window_bounds = array<i64: 1, 256>}, {transform_indices = @transform_5, window_bounds = array<i64: 32, 128>}]} {
    %c0 = arith.constant 0 : index
    %c0_0 = arith.constant 0 : index
    %0 = vector.load %arg1[%c0, %c0_0] : memref<32x128xf32, #tpu.memory_space<vmem>>, vector<32x128xf32>
    %c0_1 = arith.constant 0 : index
    %c0_2 = arith.constant 0 : index
    %1 = vector.load %arg2[%c0_1, %c0_2] : memref<128x128xf32, #tpu.memory_space<vmem>>, vector<128x128xf32>
    %cst = arith.constant dense<0.000000e+00> : vector<32x128xf32>
    %2 = tpu.matmul %0, %1, %cst {dimension_numbers = #tpu.dot_dimension_numbers<[1], [0], [0], [1], [0, 0, 1, 1], [], []>} : vector<32x128xf32>, vector<128x128xf32>, vector<32x128xf32> -> vector<32x128xf32>
    %c0_3 = arith.constant 0 : index
    %c0_4 = arith.constant 0 : index
    %3 = vector.load %arg3[%c0_3, %c0_4] : memref<1x128xf32, #tpu.memory_space<vmem>>, vector<1x128xf32>
    %4 = vector.broadcast %3 : vector<1x128xf32> to vector<32x128xf32>
    %5 = arith.addf %2, %4 : vector<32x128xf32>
    %cst_5 = arith.constant 0.000000e+00 : f32
    %6 = vector.broadcast %cst_5 : f32 to vector<32x128xf32>
    %7 = arith.maximumf %5, %6 : vector<32x128xf32>
    %c0_6 = arith.constant 0 : index
    %c0_7 = arith.constant 0 : index
    %8 = vector.load %arg4[%c0_6, %c0_7] : memref<128x256xf32, #tpu.memory_space<vmem>>, vector<128x256xf32>
    %cst_8 = arith.constant dense<0.000000e+00> : vector<32x256xf32>
    %9 = tpu.matmul %7, %8, %cst_8 {dimension_numbers = #tpu.dot_dimension_numbers<[1], [0], [0], [1], [0, 0, 1, 1], [], []>} : vector<32x128xf32>, vector<128x256xf32>, vector<32x256xf32> -> vector<32x256xf32>
    %c0_9 = arith.constant 0 : index
    %c0_10 = arith.constant 0 : index
    %10 = vector.load %arg5[%c0_9, %c0_10] : memref<1x256xf32, #tpu.memory_space<vmem>>, vector<1x256xf32>
    %11 = vector.broadcast %10 : vector<1x256xf32> to vector<32x256xf32>
    %12 = arith.addf %9, %11 : vector<32x256xf32>
    %13 = vector.extract_strided_slice %12 {offsets = [0, 0], sizes = [32, 128], strides = [1, 1]} : vector<32x256xf32> to vector<32x128xf32>
    %14 = vector.extract_strided_slice %12 {offsets = [0, 128], sizes = [32, 128], strides = [1, 1]} : vector<32x256xf32> to vector<32x128xf32>
    %15 = arith.mulf %13, %13 : vector<32x128xf32>
    %16 = arith.mulf %14, %14 : vector<32x128xf32>
    %17 = arith.addf %15, %16 : vector<32x128xf32>
    %18 = math.sqrt %17 : vector<32x128xf32>
    %19 = tpu.iota {dimensions = array<i32: 1>} : vector<32x128xi32>
    %c10_i32 = arith.constant 10 : i32
    %20 = vector.broadcast %c10_i32 : i32 to vector<32x128xi32>
    %21 = arith.cmpi slt, %19, %20 : vector<32x128xi32>
    %cst_11 = arith.constant 0xFF800000 : f32
    %22 = vector.broadcast %cst_11 : f32 to vector<32x128xf32>
    %23 = arith.select %21, %18, %22 : vector<32x128xi1>, vector<32x128xf32>
    %cst_12 = arith.constant dense<0xFF800000> : vector<32xf32>
    %24 = vector.multi_reduction <maximumf>, %23, %cst_12 [1] : vector<32x128xf32> to vector<32xf32>
    %25 = vector.shape_cast %24 : vector<32xf32> to vector<32x1xf32>
    %26 = vector.broadcast %25 : vector<32x1xf32> to vector<32x128xf32>
    %27 = arith.subf %18, %26 : vector<32x128xf32>
    %28 = math.exp %27 : vector<32x128xf32>
    %cst_13 = arith.constant 0.000000e+00 : f32
    %29 = vector.broadcast %cst_13 : f32 to vector<32x128xf32>
    %30 = arith.select %21, %28, %29 : vector<32x128xi1>, vector<32x128xf32>
    %cst_14 = arith.constant dense<0.000000e+00> : vector<32xf32>
    %31 = vector.multi_reduction <add>, %30, %cst_14 [1] : vector<32x128xf32> to vector<32xf32>
    %32 = vector.shape_cast %31 : vector<32xf32> to vector<32x1xf32>
    %33 = math.log %32 : vector<32x1xf32>
    %34 = arith.addf %33, %25 : vector<32x1xf32>
    %35 = vector.broadcast %34 : vector<32x1xf32> to vector<32x128xf32>
    %36 = arith.subf %18, %35 : vector<32x128xf32>
    %c0_15 = arith.constant 0 : index
    %c0_16 = arith.constant 0 : index
    %37 = vector.load %arg6[%c0_15, %c0_16] : memref<32x128xf32, #tpu.memory_space<vmem>>, vector<32x128xf32>
    tpu.vector_store %arg6[%c0_15, %c0_16], %36 {strides = array<i32>} : memref<32x128xf32, #tpu.memory_space<vmem>>, vector<32x128xf32>,
    return
  }
  func.func @transform_0(%arg0: i32) -> (i32, i32) {
    %c0_i32 = arith.constant 0 : i32
    %c0_i32_0 = arith.constant 0 : i32
    return %arg0, %c0_i32 : i32, i32
  }
  func.func @transform_1(%arg0: i32) -> (i32, i32) {
    %c0_i32 = arith.constant 0 : i32
    %c0_i32_0 = arith.constant 0 : i32
    %c0_i32_1 = arith.constant 0 : i32
    return %c0_i32, %c0_i32_0 : i32, i32
  }
  func.func @transform_2(%arg0: i32) -> (i32, i32) {
    %c0_i32 = arith.constant 0 : i32
    %c0_i32_0 = arith.constant 0 : i32
    %c0_i32_1 = arith.constant 0 : i32
    return %c0_i32, %c0_i32_0 : i32, i32
  }
  func.func @transform_3(%arg0: i32) -> (i32, i32) {
    %c0_i32 = arith.constant 0 : i32
    %c0_i32_0 = arith.constant 0 : i32
    %c0_i32_1 = arith.constant 0 : i32
    return %c0_i32, %c0_i32_0 : i32, i32
  }
  func.func @transform_4(%arg0: i32) -> (i32, i32) {
    %c0_i32 = arith.constant 0 : i32
    %c0_i32_0 = arith.constant 0 : i32
    %c0_i32_1 = arith.constant 0 : i32
    return %c0_i32, %c0_i32_0 : i32, i32
  }
  func.func @transform_5(%arg0: i32) -> (i32, i32) {
    %c0_i32 = arith.constant 0 : i32
    %c0_i32_0 = arith.constant 0 : i32
    return %arg0, %c0_i32 : i32, i32
  }
}

</mosaic_0001>

<llo_original>
// kernel: tpu_custom_call.1
$region0: #{tpu_custom_call.1}
  #allocation0 [shape = 'u32[]', space=smem, size = 0x4, offset = 0x4, fixed_abs, tag = 'smem constant byte address 0x4 - core index']
  #allocation1 [shape = 'u32[144,128]{1,0:T(1,128)}', space=vmem, size = 0x12000, scoped, tag = 'internal scratch']
  %s0 = inlined_call_operand.hbm [shape: f32[64,128], index: 0, kind: input, shape index: {}]
  %s1 = inlined_call_operand.hbm [shape: f32[128,128], index: 1, kind: input, shape index: {}]
  %s2 = inlined_call_operand.vmem [shape: f32[1,128], index: 2, kind: input, shape index: {}]
  %s3 = inlined_call_operand.hbm [shape: f32[128,256], index: 3, kind: input, shape index: {}]
  %s4 = inlined_call_operand.vmem [shape: f32[1,256], index: 4, kind: input, shape index: {}]
  %s5 = inlined_call_operand.hbm [shape: f32[64,128], index: 5, kind: output, shape index: {}]
  %s6 = sld [smem:[#allocation0]]
  $region65: #{tpu_custom_call.1} parent=0
    _
  %s8 = ssub.s32 1, %s6
  %s9 = scalar_select 0, %s8, %s6
  $region1: #{tpu_custom_call.1} parent=0
    #allocation2 [shape = 'u8[32768]{0}', space=vmem, size = 0x8000, scoped, tag = 'input window, operand 0']
    #allocation3 [shape = 's32[2]{0}', space=sflag, size = 0x8, scoped, tag = 'scoped memory for tpu_custom_call.1']
    #allocation4 [shape = 's32[2]{0}', space=sflag, size = 0x8, scoped, tag = 'scoped memory for tpu_custom_call.1']
    #allocation5 [shape = 'u8[65536]{0}', space=vmem, size = 0x10000, scoped, tag = 'input window, operand 1, single buffered']
    #allocation6 [shape = 's32[1]{0}', space=sflag, size = 0x4, scoped, tag = 'scoped memory for tpu_custom_call.1']
    #allocation7 [shape = 'u8[131072]{0}', space=vmem, size = 0x20000, scoped, tag = 'input window, operand 3, single buffered']
    #allocation8 [shape = 'u8[32768]{0}', space=vmem, size = 0x8000, scoped, tag = 'output window, operand 0']
    %10 = vsyncpa [#allocation3], 0
    %s11 = scalar_lea.sflag [#allocation3], 1
    %12 = vsyncpa %s11, 0
    %13 = vsyncpa [#allocation6], 0
    %14 = vsyncpa [#allocation4], 0
    %s15 = scalar_lea.sflag [#allocation4], 1
    %16 = vsyncpa %s15, 0
    loop: start=0, step=1, limit=4
    $region2: #{tpu_custom_call.1} parent=1 // loop_pre_header
      _
    $region3: #{tpu_custom_call.1} parent=1 // loop_header
      %s18 = sphi 0, %s22
      %p19 = scmp.ge.s32.totalorder %s18, 4
      %s28 = sphi 0, %s30
      %s31 = sphi 0, %s28
      %s32 = sphi 0, %s31
      %s48 = sphi 0, %s32
      %s52 = sphi 0, %s52
      %s54 = sphi 0, %s52
      %s55 = sphi 0, %s54
      %s69 = sphi 0, %s55
      %s73 = sphi 0, %s73
      %s75 = sphi 0, %s73
      %s76 = sphi 0, %s75
      %s90 = sphi 0, %s76
      %s94 = sphi 0, %s94
      %s96 = sphi 0, %s94
      %s97 = sphi 0, %s96
      %s111 = sphi 0, %s97
      %s115 = sphi 0, %s115
      %s117 = sphi 0, %s115
      %s118 = sphi 0, %s117
      %s132 = sphi 0, %s118
      %s138 = sphi 0, %s140
      %s141 = sphi 0, %s138
      %s142 = sphi 0, %s141
      %s158 = sphi 0, %s142
    $region4: #{tpu_custom_call.1} parent=1 // loop_header_branch
      %21 = sbr.rel (%p19) target = $region8
    $region5: #{tpu_custom_call.1} parent=1 // loop_body
      %s23 = ssub.s32 %s18, 1
      %s24 = ssub.s32 %s18, 2
      %s25 = sadd.s32 %s18, 1
      %s26 = ssub.s32 %s18, %s25
      %p27 = scmp.eq.s32.totalorder %s26, 0
      %s29 = sadd.s32 %s28, 1
      %s30 = scalar_select %p27, %s28, %s29
      %p33 = pneg %p27
      %p34 = scmp.eq.s32.totalorder %s18, 1
      %p35 = por %p33, %p34
      %p36 = scmp.ne.s32.totalorder %s28, %s31
      %p37 = scmp.eq.s32.totalorder %s18, 0
      %p38 = por %p36, %p37
      %p39 = scmp.ne.s32.totalorder %s28, %s31
      %p40 = scmp.eq.s32.totalorder %s23, 1
      %p41 = por %p39, %p40
      %p42 = scmp.ne.s32.totalorder %s31, %s32
      %p43 = scmp.eq.s32.totalorder %s23, 0
      %p44 = por %p42, %p43
      %p45 = scmp.ne.s32.totalorder %s31, %s32
      %p46 = scmp.eq.s32.totalorder %s24, 1
      %p47 = por %p45, %p46
      %p49 = scmp.ne.s32.totalorder %s32, %s48
      %p50 = scmp.eq.s32.totalorder %s24, 0
      %p51 = por %p49, %p50
      %s53 = sadd.s32 %s52, 1
      %p56 = scmp.eq.s32.totalorder %s18, 1
      %p57 = scmp.ne.s32.totalorder %s52, %s54
      %p58 = scmp.eq.s32.totalorder %s18, 0
      %p59 = por %p57, %p58
      %p60 = scmp.ne.s32.totalorder %s52, %s54
      %p61 = scmp.eq.s32.totalorder %s23, 1
      %p62 = por %p60, %p61
      %p63 = scmp.ne.s32.totalorder %s54, %s55
      %p64 = scmp.eq.s32.totalorder %s23, 0
      %p65 = por %p63, %p64
      %p66 = scmp.ne.s32.totalorder %s54, %s55
      %p67 = scmp.eq.s32.totalorder %s24, 1
      %p68 = por %p66, %p67
      %p70 = scmp.ne.s32.totalorder %s55, %s69
      %p71 = scmp.eq.s32.totalorder %s24, 0
      %p72 = por %p70, %p71
      %s74 = sadd.s32 %s73, 1
      %p77 = scmp.eq.s32.totalorder %s18, 1
      %p78 = scmp.ne.s32.totalorder %s73, %s75
      %p79 = scmp.eq.s32.totalorder %s18, 0
      %p80 = por %p78, %p79
      %p81 = scmp.ne.s32.totalorder %s73, %s75
      %p82 = scmp.eq.s32.totalorder %s23, 1
      %p83 = por %p81, %p82
      %p84 = scmp.ne.s32.totalorder %s75, %s76
      %p85 = scmp.eq.s32.totalorder %s23, 0
      %p86 = por %p84, %p85
      %p87 = scmp.ne.s32.totalorder %s75, %s76
      %p88 = scmp.eq.s32.totalorder %s24, 1
      %p89 = por %p87, %p88
      %p91 = scmp.ne.s32.totalorder %s76, %s90
      %p92 = scmp.eq.s32.totalorder %s24, 0
      %p93 = por %p91, %p92
      %s95 = sadd.s32 %s94, 1
      %p98 = scmp.eq.s32.totalorder %s18, 1
      %p99 = scmp.ne.s32.totalorder %s94, %s96
      %p100 = scmp.eq.s32.totalorder %s18, 0
      %p101 = por %p99, %p100
      %p102 = scmp.ne.s32.totalorder %s94, %s96
      %p103 = scmp.eq.s32.totalorder %s23, 1
      %p104 = por %p102, %p103
      %p105 = scmp.ne.s32.totalorder %s96, %s97
      %p106 = scmp.eq.s32.totalorder %s23, 0
      %p107 = por %p105, %p106
      %p108 = scmp.ne.s32.totalorder %s96, %s97
      %p109 = scmp.eq.s32.totalorder %s24, 1
      %p110 = por %p108, %p109
      %p112 = scmp.ne.s32.totalorder %s97, %s111
      %p113 = scmp.eq.s32.totalorder %s24, 0
      %p114 = por %p112, %p113
      %s116 = sadd.s32 %s115, 1
      %p119 = scmp.eq.s32.totalorder %s18, 1
      %p120 = scmp.ne.s32.totalorder %s115, %s117
      %p121 = scmp.eq.s32.totalorder %s18, 0
      %p122 = por %p120, %p121
      %p123 = scmp.ne.s32.totalorder %s115, %s117
      %p124 = scmp.eq.s32.totalorder %s23, 1
      %p125 = por %p123, %p124
      %p126 = scmp.ne.s32.totalorder %s117, %s118
      %p127 = scmp.eq.s32.totalorder %s23, 0
      %p128 = por %p126, %p127
      %p129 = scmp.ne.s32.totalorder %s117, %s118
      %p130 = scmp.eq.s32.totalorder %s24, 1
      %p131 = por %p129, %p130
      %p133 = scmp.ne.s32.totalorder %s118, %s132
      %p134 = scmp.eq.s32.totalorder %s24, 0
      %p135 = por %p133, %p134
      %s136 = ssub.s32 %s18, %s25
      %p137 = scmp.eq.s32.totalorder %s136, 0
      %s139 = sadd.s32 %s138, 1
      %s140 = scalar_select %p137, %s138, %s139
      %p143 = pneg %p137
      %p144 = scmp.eq.s32.totalorder %s18, 1
      %p145 = por %p143, %p144
      %p146 = scmp.ne.s32.totalorder %s138, %s141
      %p147 = scmp.eq.s32.totalorder %s18, 0
      %p148 = por %p146, %p147
      %p149 = scmp.ne.s32.totalorder %s138, %s141
      %p150 = scmp.eq.s32.totalorder %s23, 1
      %p151 = por %p149, %p150
      %p152 = scmp.ne.s32.totalorder %s141, %s142
      %p153 = scmp.eq.s32.totalorder %s23, 0
      %p154 = por %p152, %p153
      %p155 = scmp.ne.s32.totalorder %s141, %s142
      %p156 = scmp.eq.s32.totalorder %s24, 1
      %p157 = por %p155, %p156
      %p159 = scmp.ne.s32.totalorder %s142, %s158
      %p160 = scmp.eq.s32.totalorder %s24, 0
      %p161 = por %p159, %p160
      %p162 = scmp.le.s32.totalorder 1, %s18
      %p163 = scmp.lt.s32.totalorder %s18, 3
      %p164 = pnand %p162, %p163
      %p165 = pneg %p164
      // Predicated region
      $region9: #{tpu_custom_call.1} parent=5 // pred_check
        _
      $region10: #{tpu_custom_call.1} parent=5 // pred_check_branch
        %167 = sbr.rel (%p164) target = $region12
      $region11: #{tpu_custom_call.1} parent=5 // pred_region
        %s168 = ssub.s32 %s18, 1
        // Predicated region
        $region13: #{tpu_custom_call.1} parent=11 // pred_check
          %p169 = pneg %p65
        $region14: #{tpu_custom_call.1} parent=11 // pred_check_branch
          %171 = sbr.rel (%p169) target = $region16
        $region15: #{tpu_custom_call.1} parent=11 // pred_region
          %s173 = ssub.s32 2048, 2048
          %174 = vsyncadd [#allocation6], %s173
          %s175 = sshll.u32 [#allocation5], 4
          %s176 = int_to_ptr.vmem [resolvable:$true] %s175
          %181 = dma.hbm_to_vmem [thread:$0]  %s1, 2048, %s176, [#allocation6], 128, 128, 8
        $region16: #{tpu_custom_call.1} parent=11 // pred_fallthru
          _
        // Predicated region
        $region17: #{tpu_custom_call.1} parent=11 // pred_check
          %p182 = pneg %p86
        $region18: #{tpu_custom_call.1} parent=11 // pred_check_branch
          %184 = sbr.rel (%p182) target = $region20
        $region19: #{tpu_custom_call.1} parent=11 // pred_region
          _
        $region20: #{tpu_custom_call.1} parent=11 // pred_fallthru
          _
        // Predicated region
        $region21: #{tpu_custom_call.1} parent=11 // pred_check
          %p185 = pneg %p107
        $region22: #{tpu_custom_call.1} parent=11 // pred_check_branch
          %187 = sbr.rel (%p185) target = $region24
        $region23: #{tpu_custom_call.1} parent=11 // pred_region
          %s189 = ssub.s32 4096, 4096
          %190 = vsyncadd [#allocation6], %s189
          %s191 = sshll.u32 [#allocation7], 4
          %s192 = int_to_ptr.vmem [resolvable:$true] %s191
          %197 = dma.hbm_to_vmem [thread:$0]  %s3, 4096, %s192, [#allocation6], 256, 256, 16
        $region24: #{tpu_custom_call.1} parent=11 // pred_fallthru
          _
        // Predicated region
        $region25: #{tpu_custom_call.1} parent=11 // pred_check
          %p198 = pneg %p128
        $region26: #{tpu_custom_call.1} parent=11 // pred_check_branch
          %200 = sbr.rel (%p198) target = $region28
        $region27: #{tpu_custom_call.1} parent=11 // pred_region
          _
        $region28: #{tpu_custom_call.1} parent=11 // pred_fallthru
          _
      $region12: #{tpu_custom_call.1} parent=5 // pred_fallthru
        _
      %p201 = scmp.lt.s32.totalorder %s18, 2
      // Predicated region
      $region29: #{tpu_custom_call.1} parent=5 // pred_check
        %p202 = pneg %p201
      $region30: #{tpu_custom_call.1} parent=5 // pred_check_branch
        %204 = sbr.rel (%p202) target = $region32
      $region31: #{tpu_custom_call.1} parent=5 // pred_region
        // Predicated region
        $region33: #{tpu_custom_call.1} parent=31 // pred_check
          %p205 = pneg %p38
        $region34: #{tpu_custom_call.1} parent=31 // pred_check_branch
          %207 = sbr.rel (%p205) target = $region36
        $region35: #{tpu_custom_call.1} parent=31 // pred_region
          %s208 = sand.u32 %s28, 1
          %s209 = scalar_lea.sflag [#allocation3], %s208
          %s210 = sand.u32 %s28, 1
          %s211 = smul.addr %s210, 32
          %s212 = scalar_lea.vmem [#allocation2], %s211
          %s213 = smul.u32 4, %s18
          %s215 = ssub.s32 512, 512
          %216 = vsyncadd %s209, %s215
          %s217 = smul.addr %s213, 128
          %s218 = scalar_lea.hbm %s0, %s217
          %s219 = sshll.u32 %s212, 4
          %s220 = int_to_ptr.vmem [resolvable:$true] %s219
          %225 = dma.hbm_to_vmem [thread:$0]  %s218, 512, %s220, %s209, 128, 128, 8
        $region36: #{tpu_custom_call.1} parent=31 // pred_fallthru
          _
      $region32: #{tpu_custom_call.1} parent=5 // pred_fallthru
        _
      %p226 = scmp.le.s32.totalorder 1, %s18
      %p227 = scmp.lt.s32.totalorder %s18, 3
      %p228 = pnand %p226, %p227
      %p229 = pneg %p228
      // Predicated region
      $region37: #{tpu_custom_call.1} parent=5 // pred_check
        _
      $region38: #{tpu_custom_call.1} parent=5 // pred_check_branch
        %231 = sbr.rel (%p228) target = $region40
      $region39: #{tpu_custom_call.1} parent=5 // pred_region
        %s232 = ssub.s32 %s18, 1
        %s233 = sand.u32 %s31, 1
        %s234 = scalar_lea.sflag [#allocation3], %s233
        %s235 = sand.u32 %s31, 1
        %s236 = smul.addr %s235, 32
        %s237 = scalar_lea.vmem [#allocation2], %s236
        // Predicated region
        $region41: #{tpu_custom_call.1} parent=39 // pred_check
          %p238 = pneg %p44
        $region42: #{tpu_custom_call.1} parent=39 // pred_check_branch
          %240 = sbr.rel (%p238) target = $region44
        $region43: #{tpu_custom_call.1} parent=39 // pred_region
          %241 = dma.done %s234, 512
        $region44: #{tpu_custom_call.1} parent=39 // pred_fallthru
          _
        // Predicated region
        $region45: #{tpu_custom_call.1} parent=39 // pred_check
          %p242 = pneg %p65
        $region46: #{tpu_custom_call.1} parent=39 // pred_check_branch
          %244 = sbr.rel (%p242) target = $region48
        $region47: #{tpu_custom_call.1} parent=39 // pred_region
          %245 = dma.done [#allocation6], 2048
        $region48: #{tpu_custom_call.1} parent=39 // pred_fallthru
          _
        // Predicated region
        $region49: #{tpu_custom_call.1} parent=39 // pred_check
          %p246 = pneg %p107
        $region50: #{tpu_custom_call.1} parent=39 // pred_check_branch
          %248 = sbr.rel (%p246) target = $region52
        $region51: #{tpu_custom_call.1} parent=39 // pred_region
          %249 = dma.done [#allocation6], 4096
        $region52: #{tpu_custom_call.1} parent=39 // pred_fallthru
          _
        %s250 = sand.u32 %s31, 1
        %s251 = scalar_lea.sflag [#allocation3], %s250
        %s252 = sand.u32 %s31, 1
        %s253 = smul.addr %s252, 32
        %s254 = scalar_lea.vmem [#allocation2], %s253
        %p255 = pneg %p44
        %p256 = pneg %p41
        %p257 = pneg %p65
        %p258 = pneg %p62
        %p259 = pneg %p86
        %p260 = pneg %p83
        %p261 = pneg %p107
        %p262 = pneg %p104
        %p263 = pneg %p128
        %p264 = pneg %p125
        %p265 = pneg %p154
        %p266 = pneg %p151
        %s267 = sand.u32 %s141, 1
        %s268 = scalar_lea.sflag [#allocation4], %s267
        %s269 = sand.u32 %s141, 1
        %s270 = smul.addr %s269, 32
        %s271 = scalar_lea.vmem [#allocation8], %s270
        %s272 = smul.u32 4, %s23
        %s273 = smul.u32 4, %s23
        %v274 = vld [vmem:[%s237] sm:$0xff]
        %v275 = vld [vmem:[%s237 + $0x8] sm:$0xff]
        %v276 = vld [vmem:[%s237 + $0x10] sm:$0xff]
        %v277 = vld [vmem:[%s237 + $0x18] sm:$0xff]
        %v278 = vld [vmem:[#allocation5] sm:$0xff]
        %v279 = vld [vmem:[#allocation5 + $0x8] sm:$0xff]
        %v280 = vld [vmem:[#allocation5 + $0x10] sm:$0xff]
        %v281 = vld [vmem:[#allocation5 + $0x18] sm:$0xff]
        %v282 = vld [vmem:[#allocation5 + $0x20] sm:$0xff]
        %v283 = vld [vmem:[#allocation5 + $0x28] sm:$0xff]
        %v284 = vld [vmem:[#allocation5 + $0x30] sm:$0xff]
        %v285 = vld [vmem:[#allocation5 + $0x38] sm:$0xff]
        %v286 = vld [vmem:[#allocation5 + $0x40] sm:$0xff]
        %v287 = vld [vmem:[#allocation5 + $0x48] sm:$0xff]
        %v288 = vld [vmem:[#allocation5 + $0x50] sm:$0xff]
        %v289 = vld [vmem:[#allocation5 + $0x58] sm:$0xff]
        %v290 = vld [vmem:[#allocation5 + $0x60] sm:$0xff]
        %v291 = vld [vmem:[#allocation5 + $0x68] sm:$0xff]
        %v292 = vld [vmem:[#allocation5 + $0x70] sm:$0xff]
        %v293 = vld [vmem:[#allocation5 + $0x78] sm:$0xff]
        %v294 = vld [vmem:[%s2] sm:$0x1]
        %v296 = vlaneseq
        %v297 = vshrl.u32 %v296, 7
        %v298 = vsub.s32 0, %v297
        %v299 = vrot.slane %v294, %v298
        %301 = vmatprep.subr.mxu0 0.0
        %302 = vmatpush1.msra.mxu0 %v293
        %303 = vmatprep.subr.mxu0 0.0
        %304 = vmatpush1.msra.mxu0 %v292
        %305 = vmatprep.subr.mxu0 0.0
        %306 = vmatpush1.msra.mxu0 %v291
        %307 = vmatprep.subr.mxu0 0.0
        %308 = vmatpush1.msra.mxu0 %v290
        %309 = vmatprep.subr.mxu0 0.0
        %310 = vmatpush1.msra.mxu0 %v289
        %311 = vmatprep.subr.mxu0 0.0
        %312 = vmatpush1.msra.mxu0 %v288
        %313 = vmatprep.subr.mxu0 0.0
        %314 = vmatpush1.msra.mxu0 %v287
        %315 = vmatprep.subr.mxu0 0.0
        %316 = vmatpush1.msra.mxu0 %v286
        %317 = vmatprep.subr.mxu0 0.0
        %318 = vmatpush1.msra.mxu0 %v285
        %319 = vmatprep.subr.mxu0 0.0
        %320 = vmatpush1.msra.mxu0 %v284
        %321 = vmatprep.subr.mxu0 0.0
        %322 = vmatpush1.msra.mxu0 %v283
        %323 = vmatprep.subr.mxu0 0.0
        %324 = vmatpush1.msra.mxu0 %v282
        %325 = vmatprep.subr.mxu0 0.0
        %326 = vmatpush1.msra.mxu0 %v281
        %327 = vmatprep.subr.mxu0 0.0
        %328 = vmatpush1.msra.mxu0 %v280
        %329 = vmatprep.subr.mxu0 0.0
        %330 = vmatpush1.msra.mxu0 %v279
        %331 = vmatprep.subr.mxu0 0.0
        %332 = vmatpush1.msra.mxu0 %v278
        %333 = vmatprep.subr.mxu0 0.0
        %334 = vmatpush2.msra.mxu0 0.0
        %335 = vmatprep.subr.mxu0 0.0
        %336 = vmatpush2.msra.mxu0 0.0
        %337 = vmatprep.subr.mxu0 0.0
        %338 = vmatpush2.msra.mxu0 0.0
        %339 = vmatprep.subr.mxu0 0.0
        %340 = vmatpush2.msra.mxu0 0.0
        %341 = vmatprep.subr.mxu0 0.0
        %342 = vmatpush2.msra.mxu0 0.0
        %343 = vmatprep.subr.mxu0 0.0
        %344 = vmatpush2.msra.mxu0 0.0
        %345 = vmatprep.subr.mxu0 0.0
        %346 = vmatpush2.msra.mxu0 0.0
        %347 = vmatprep.subr.mxu0 0.0
        %348 = vmatpush2.msra.mxu0 0.0
        %349 = vmatprep.subr.mxu0 0.0
        %350 = vmatpush2.msra.mxu0 0.0
        %351 = vmatprep.subr.mxu0 0.0
        %352 = vmatpush2.msra.mxu0 0.0
        %353 = vmatprep.subr.mxu0 0.0
        %354 = vmatpush2.msra.mxu0 0.0
        %355 = vmatprep.subr.mxu0 0.0
        %356 = vmatpush2.msra.mxu0 0.0
        %357 = vmatprep.subr.mxu0 0.0
        %358 = vmatpush2.msra.mxu0 0.0
        %359 = vmatprep.subr.mxu0 0.0
        %360 = vmatpush2.msra.mxu0 0.0
        %361 = vmatprep.subr.mxu0 0.0
        %362 = vmatpush2.msra.mxu0 0.0
        %363 = vmatprep.subr.mxu0 0.0
        %364 = vmatpush2.msra.mxu0 0.0
        %365 = vmatprep.mubr.f32.mxu0 0.0
        %366 = vmatmul.mubr.f32.gmra.mxu0 %v274
        %v367 = vpop.f32.mrf.mxu0
        %v368 = vadd.f32 %v299, %v367
        %v369 = vpop.f32.mrf.mxu0
        %370 = vmatprep.mubr.f32.mxu0 0.0
        %371 = vmatmul.mubr.f32.gmra.mxu0 %v275
        %v372 = vpop.f32.mrf.mxu0
        %v373 = vadd.f32 %v299, %v372
        %v374 = vpop.f32.mrf.mxu0
        %375 = vmatprep.mubr.f32.mxu0 0.0
        %376 = vmatmul.mubr.f32.gmra.mxu0 %v276
        %v377 = vpop.f32.mrf.mxu0
        %v378 = vadd.f32 %v299, %v377
        %v379 = vpop.f32.mrf.mxu0
        %380 = vmatprep.mubr.f32.mxu0 0.0
        %381 = vmatmul.mubr.f32.gmra.mxu0 %v277
        %v382 = vpop.f32.mrf.mxu0
        %v383 = vadd.f32 %v299, %v382
        %v384 = vpop.f32.mrf.mxu0
        %385 = vdwg.mxu0
        %v386 = vmax.f32 %v368, 0.0
        %v387 = vmax.f32 %v373, 0.0
        %v388 = vmax.f32 %v378, 0.0
        %v389 = vmax.f32 %v383, 0.0
        %v390 = vld [vmem:[#allocation7] sm:$0xff]
        %v391 = vld [vmem:[#allocation7 + $0x8] sm:$0xff]
        %v392 = vld [vmem:[#allocation7 + $0x10] sm:$0xff]
        %v393 = vld [vmem:[#allocation7 + $0x18] sm:$0xff]
        %v394 = vld [vmem:[#allocation7 + $0x20] sm:$0xff]
        %v395 = vld [vmem:[#allocation7 + $0x28] sm:$0xff]
        %v396 = vld [vmem:[#allocation7 + $0x30] sm:$0xff]
        %v397 = vld [vmem:[#allocation7 + $0x38] sm:$0xff]
        %v398 = vld [vmem:[#allocation7 + $0x40] sm:$0xff]
        %v399 = vld [vmem:[#allocation7 + $0x48] sm:$0xff]
        %v400 = vld [vmem:[#allocation7 + $0x50] sm:$0xff]
        %v401 = vld [vmem:[#allocation7 + $0x58] sm:$0xff]
        %v402 = vld [vmem:[#allocation7 + $0x60] sm:$0xff]
        %v403 = vld [vmem:[#allocation7 + $0x68] sm:$0xff]
        %v404 = vld [vmem:[#allocation7 + $0x70] sm:$0xff]
        %v405 = vld [vmem:[#allocation7 + $0x78] sm:$0xff]
        %v406 = vld [vmem:[#allocation7 + $0x80] sm:$0xff]
        %v407 = vld [vmem:[#allocation7 + $0x88] sm:$0xff]
        %v408 = vld [vmem:[#allocation7 + $0x90] sm:$0xff]
        %v409 = vld [vmem:[#allocation7 + $0x98] sm:$0xff]
        %v410 = vld [vmem:[#allocation7 + $0xa0] sm:$0xff]
        %v411 = vld [vmem:[#allocation7 + $0xa8] sm:$0xff]
        %v412 = vld [vmem:[#allocation7 + $0xb0] sm:$0xff]
        %v413 = vld [vmem:[#allocation7 + $0xb8] sm:$0xff]
        %v414 = vld [vmem:[#allocation7 + $0xc0] sm:$0xff]
        %v415 = vld [vmem:[#allocation7 + $0xc8] sm:$0xff]
        %v416 = vld [vmem:[#allocation7 + $0xd0] sm:$0xff]
        %v417 = vld [vmem:[#allocation7 + $0xd8] sm:$0xff]
        %v418 = vld [vmem:[#allocation7 + $0xe0] sm:$0xff]
        %v419 = vld [vmem:[#allocation7 + $0xe8] sm:$0xff]
        %v420 = vld [vmem:[#allocation7 + $0xf0] sm:$0xff]
        %v421 = vld [vmem:[#allocation7 + $0xf8] sm:$0xff]
        %v422 = vld [vmem:[%s4] sm:$0x3]
        %v424 = vlaneseq
        %v425 = vshrl.u32 %v424, 7
        %v426 = vsub.s32 0, %v425
        %v427 = vrot.slane %v422, %v426
        %v428 = vlaneseq
        %v429 = vshrl.u32 %v428, 7
        %v430 = vsub.s32 1, %v429
        %v431 = vrot.slane %v422, %v430
        %434 = vmatprep.subr.mxu0 %v421
        %435 = vmatpush1.msra.mxu0 %v420
        %436 = vmatprep.subr.mxu0 %v419
        %437 = vmatpush1.msra.mxu0 %v418
        %438 = vmatprep.subr.mxu0 %v417
        %439 = vmatpush1.msra.mxu0 %v416
        %440 = vmatprep.subr.mxu0 %v415
        %441 = vmatpush1.msra.mxu0 %v414
        %442 = vmatprep.subr.mxu0 %v413
        %443 = vmatpush1.msra.mxu0 %v412
        %444 = vmatprep.subr.mxu0 %v411
        %445 = vmatpush1.msra.mxu0 %v410
        %446 = vmatprep.subr.mxu0 %v409
        %447 = vmatpush1.msra.mxu0 %v408
        %448 = vmatprep.subr.mxu0 %v407
        %449 = vmatpush1.msra.mxu0 %v406
        %450 = vmatprep.subr.mxu0 %v405
        %451 = vmatpush1.msra.mxu0 %v404
        %452 = vmatprep.subr.mxu0 %v403
        %453 = vmatpush1.msra.mxu0 %v402
        %454 = vmatprep.subr.mxu0 %v401
        %455 = vmatpush1.msra.mxu0 %v400
        %456 = vmatprep.subr.mxu0 %v399
        %457 = vmatpush1.msra.mxu0 %v398
        %458 = vmatprep.subr.mxu0 %v397
        %459 = vmatpush1.msra.mxu0 %v396
        %460 = vmatprep.subr.mxu0 %v395
        %461 = vmatpush1.msra.mxu0 %v394
        %462 = vmatprep.subr.mxu0 %v393
        %463 = vmatpush1.msra.mxu0 %v392
        %464 = vmatprep.subr.mxu0 %v391
        %465 = vmatpush1.msra.mxu0 %v390
        %466 = vmatprep.subr.mxu0 0.0
        %467 = vmatpush2.msra.mxu0 0.0
        %468 = vmatprep.subr.mxu0 0.0
        %469 = vmatpush2.msra.mxu0 0.0
        %470 = vmatprep.subr.mxu0 0.0
        %471 = vmatpush2.msra.mxu0 0.0
        %472 = vmatprep.subr.mxu0 0.0
        %473 = vmatpush2.msra.mxu0 0.0
        %474 = vmatprep.subr.mxu0 0.0
        %475 = vmatpush2.msra.mxu0 0.0
        %476 = vmatprep.subr.mxu0 0.0
        %477 = vmatpush2.msra.mxu0 0.0
        %478 = vmatprep.subr.mxu0 0.0
        %479 = vmatpush2.msra.mxu0 0.0
        %480 = vmatprep.subr.mxu0 0.0
        %481 = vmatpush2.msra.mxu0 0.0
        %482 = vmatprep.subr.mxu0 0.0
        %483 = vmatpush2.msra.mxu0 0.0
        %484 = vmatprep.subr.mxu0 0.0
        %485 = vmatpush2.msra.mxu0 0.0
        %486 = vmatprep.subr.mxu0 0.0
        %487 = vmatpush2.msra.mxu0 0.0
        %488 = vmatprep.subr.mxu0 0.0
        %489 = vmatpush2.msra.mxu0 0.0
        %490 = vmatprep.subr.mxu0 0.0
        %491 = vmatpush2.msra.mxu0 0.0
        %492 = vmatprep.subr.mxu0 0.0
        %493 = vmatpush2.msra.mxu0 0.0
        %494 = vmatprep.subr.mxu0 0.0
        %495 = vmatpush2.msra.mxu0 0.0
        %496 = vmatprep.subr.mxu0 0.0
        %497 = vmatpush2.msra.mxu0 0.0
        %498 = vmatprep.mubr.f32.mxu0 0.0
        %499 = vmatmul.mubr.f32.gmra.mxu0 %v386
        %v500 = vpop.f32.mrf.mxu0
        %v501 = vadd.f32 %v427, %v500
        %v502 = vpop.f32.mrf.mxu0
        %v503 = vadd.f32 %v431, %v502
        %504 = vmatprep.mubr.f32.mxu0 0.0
        %505 = vmatmul.mubr.f32.gmra.mxu0 %v387
        %v506 = vpop.f32.mrf.mxu0
        %v507 = vadd.f32 %v427, %v506
        %v508 = vpop.f32.mrf.mxu0
        %v509 = vadd.f32 %v431, %v508
        %510 = vmatprep.mubr.f32.mxu0 0.0
        %511 = vmatmul.mubr.f32.gmra.mxu0 %v388
        %v512 = vpop.f32.mrf.mxu0
        %v513 = vadd.f32 %v427, %v512
        %v514 = vpop.f32.mrf.mxu0
        %v515 = vadd.f32 %v431, %v514
        %516 = vmatprep.mubr.f32.mxu0 0.0
        %517 = vmatmul.mubr.f32.gmra.mxu0 %v389
        %v518 = vpop.f32.mrf.mxu0
        %v519 = vadd.f32 %v427, %v518
        %v520 = vpop.f32.mrf.mxu0
        %v521 = vadd.f32 %v431, %v520
        %522 = vdwg.mxu0
        %v523 = vmul.f32 %v501, %v501
        %v524 = vmul.f32 %v507, %v507
        %v525 = vmul.f32 %v513, %v513
        %v526 = vmul.f32 %v519, %v519
        %v527 = vmul.f32 %v503, %v503
        %v528 = vmul.f32 %v509, %v509
        %v529 = vmul.f32 %v515, %v515
        %v530 = vmul.f32 %v521, %v521
        %v531 = vadd.f32 %v523, %v527
        %v532 = vadd.f32 %v524, %v528
        %v533 = vadd.f32 %v525, %v529
        %v534 = vadd.f32 %v526, %v530
        %v535 = vrsqrt.pop %v531
        %v536 = vmul.f32 %v531, %v535
        %vm537 = vcmp.eq.f32.partialorder %v531, inf
        %v538 = vsel %vm537, %v531, %v536
        %vm539 = vcmp.eq.f32.partialorder %v531, 0.0
        %v540 = vand.u32 %v531, 2147483648
        %v541 = vsel %vm539, %v540, %v538
        %v542 = vrsqrt.pop %v532
        %v543 = vmul.f32 %v532, %v542
        %vm544 = vcmp.eq.f32.partialorder %v532, inf
        %v545 = vsel %vm544, %v532, %v543
        %vm546 = vcmp.eq.f32.partialorder %v532, 0.0
        %v547 = vand.u32 %v532, 2147483648
        %v548 = vsel %vm546, %v547, %v545
        %v549 = vrsqrt.pop %v533
        %v550 = vmul.f32 %v533, %v549
        %vm551 = vcmp.eq.f32.partialorder %v533, inf
        %v552 = vsel %vm551, %v533, %v550
        %vm553 = vcmp.eq.f32.partialorder %v533, 0.0
        %v554 = vand.u32 %v533, 2147483648
        %v555 = vsel %vm553, %v554, %v552
        %v556 = vrsqrt.pop %v534
        %v557 = vmul.f32 %v534, %v556
        %vm558 = vcmp.eq.f32.partialorder %v534, inf
        %v559 = vsel %vm558, %v534, %v557
        %vm560 = vcmp.eq.f32.partialorder %v534, 0.0
        %v561 = vand.u32 %v534, 2147483648
        %v562 = vsel %vm560, %v561, %v559
        %v563 = vlaneseq
        %v564 = vand.u32 %v563, 127
        %vm565 = vcmp.lt.s32.totalorder %v564, 10
        %v566 = vsel %vm565, %v541, -inf
        %v567 = vsel %vm565, %v548, -inf
        %v568 = vsel %vm565, %v555, -inf
        %v569 = vsel %vm565, %v562, -inf
        %570 = vmax.xlane.f32.xlu0 %v566
        %v571 = vpop.xlane.xlu0 %570
        %572 = vmax.xlane.f32.xlu0 %v567
        %v573 = vpop.xlane.xlu0 %572
        %574 = vmax.xlane.f32.xlu0 %v568
        %v575 = vpop.xlane.xlu0 %574
        %576 = vmax.xlane.f32.xlu0 %v569
        %v577 = vpop.xlane.xlu0 %576
        %v578 = vsub.f32 %v541, %v571
        %v579 = vsub.f32 %v548, %v573
        %v580 = vsub.f32 %v555, %v575
        %v581 = vsub.f32 %v562, %v577
        %v582 = vmul.f32 %v578, 1.442695
        %v583 = vpow.pop %v582
        %v584 = vmul.f32 %v579, 1.442695
        %v585 = vpow.pop %v584
        %v586 = vmul.f32 %v580, 1.442695
        %v587 = vpow.pop %v586
        %v588 = vmul.f32 %v581, 1.442695
        %v589 = vpow.pop %v588
        %v590 = vsel %vm565, %v583, 0.0
        %v591 = vsel %vm565, %v585, 0.0
        %v592 = vsel %vm565, %v587, 0.0
        %v593 = vsel %vm565, %v589, 0.0
        %594 = vadd.xlane.f32.xlu0 %v590
        %v595 = vpop.xlane.xlu0 %594
        %596 = vadd.xlane.f32.xlu0 %v591
        %v597 = vpop.xlane.xlu0 %596
        %598 = vadd.xlane.f32.xlu0 %v592
        %v599 = vpop.xlane.xlu0 %598
        %600 = vadd.xlane.f32.xlu0 %v593
        %v601 = vpop.xlane.xlu0 %600
        %v602 = vlog2.pop %v595
        %v603 = vmul.f32 %v602, 0.6931472
        %v604 = vlog2.pop %v597
        %v605 = vmul.f32 %v604, 0.6931472
        %v606 = vlog2.pop %v599
        %v607 = vmul.f32 %v606, 0.6931472
        %v608 = vlog2.pop %v601
        %v609 = vmul.f32 %v608, 0.6931472
        %v610 = vadd.f32 %v603, %v571
        %v611 = vadd.f32 %v605, %v573
        %v612 = vadd.f32 %v607, %v575
        %v613 = vadd.f32 %v609, %v577
        %v614 = vsub.f32 %v541, %v610
        %v615 = vsub.f32 %v548, %v611
        %v616 = vsub.f32 %v555, %v612
        %v617 = vsub.f32 %v562, %v613
        %618 = vst [vmem:[%s271] sm:$0xff] %v614
        %619 = vst [vmem:[%s271 + $0x8] sm:$0xff] %v615
        %620 = vst [vmem:[%s271 + $0x10] sm:$0xff] %v616
        %621 = vst [vmem:[%s271 + $0x18] sm:$0xff] %v617
        %s622 = sand.u32 %s141, 1
        %s623 = scalar_lea.sflag [#allocation4], %s622
        %s624 = sand.u32 %s141, 1
        %s625 = smul.addr %s624, 32
        %s626 = scalar_lea.vmem [#allocation8], %s625
        // Predicated region
        $region53: #{tpu_custom_call.1} parent=39 // pred_check
          %p627 = pneg %p151
        $region54: #{tpu_custom_call.1} parent=39 // pred_check_branch
          %629 = sbr.rel (%p627) target = $region56
        $region55: #{tpu_custom_call.1} parent=39 // pred_region
          %s630 = smul.u32 4, %s23
          %s632 = ssub.s32 512, 512
          %633 = vsyncadd %s623, %s632
          %s634 = smul.addr %s630, 128
          %s635 = scalar_lea.hbm %s5, %s634
          %s636 = sshll.u32 %s626, 4
          %s637 = int_to_ptr.vmem [resolvable:$true] %s636
          %642 = dma.vmem_to_hbm [thread:$0]  %s637, 512, %s635, %s623, 128, 128, 8
        $region56: #{tpu_custom_call.1} parent=39 // pred_fallthru
          _
      $region40: #{tpu_custom_call.1} parent=5 // pred_fallthru
        _
      %p643 = scmp.le.s32.totalorder 2, %s18
      // Predicated region
      $region57: #{tpu_custom_call.1} parent=5 // pred_check
        %p644 = pneg %p643
      $region58: #{tpu_custom_call.1} parent=5 // pred_check_branch
        %646 = sbr.rel (%p644) target = $region60
      $region59: #{tpu_custom_call.1} parent=5 // pred_region
        %s647 = ssub.s32 %s18, 2
        // Predicated region
        $region61: #{tpu_custom_call.1} parent=59 // pred_check
          %p648 = pneg %p157
        $region62: #{tpu_custom_call.1} parent=59 // pred_check_branch
          %650 = sbr.rel (%p648) target = $region64
        $region63: #{tpu_custom_call.1} parent=59 // pred_region
          %s651 = sand.u32 %s142, 1
          %s652 = scalar_lea.sflag [#allocation4], %s651
          %s653 = sand.u32 %s142, 1
          %s654 = smul.addr %s653, 32
          %s655 = scalar_lea.vmem [#allocation8], %s654
          %656 = dma.done %s652, 512
        $region64: #{tpu_custom_call.1} parent=59 // pred_fallthru
          _
      $region60: #{tpu_custom_call.1} parent=5 // pred_fallthru
        _
    $region6: #{tpu_custom_call.1} parent=1 // loop_footer
      %s22 = sadd.s32 1, %s18
    $region7: #{tpu_custom_call.1} parent=1 // loop_footer_branch
      %17 = sbr.rel target = $region3
    $region8: #{tpu_custom_call.1} parent=1 // loop_exit
      _
    %657 = vsyncpa [#allocation3], 1
    %s658 = scalar_lea.sflag [#allocation3], 1
    %659 = vsyncpa %s658, 1
    %660 = vsyncpa [#allocation6], 1
    %661 = vsyncpa [#allocation4], 1
    %s662 = scalar_lea.sflag [#allocation4], 1
    %663 = vsyncpa %s662, 1

</llo_original>
